<compile_context>
chip_gen: v7x
topology: tpu7x:2x2x1
jax: 0.10.0
libtpu: 0.0.40
codegen_flags: <defaults>
</compile_context>

<pallas_src>
import functools
import math

import jax
import jax.numpy as jnp
from jax import lax
from jax.experimental import pallas as pl
from jax.experimental.pallas import tpu as pltpu

_LANE = 128
_SUBLANE = 8


def _round_up(x, m):
    return ((x + m - 1) // m) * m


# ---------------------------------------------------------------------------
# Pallas kernels
# ---------------------------------------------------------------------------

def _quant_cast_kernel(qscale_ref, w_ref, o_ref):
    """Quantize one f32 weight tile to integer levels in the compute dtype.

    qscale_ref: SMEM (1,) f32 holding qmax / max_val.
    """
    o_ref[...] = jnp.round(w_ref[...] * qscale_ref[0]).astype(o_ref.dtype)


def _conv_matmul_kernel(a_ref, b_ref, deq_ref, bias_ref, o_ref):
    """Tiled matmul accumulating in place into the revisited f32 output block.

    a_ref    : (tm, tk) im2col patches tile (bf16 or f32)
    b_ref    : (tk, tn) quantized-weight tile, integer levels (bf16 or f32)
    deq_ref  : SMEM (1,) f32, max_val / qmax
    bias_ref : (1, tn) f32
    o_ref    : (tm, tn) f32 output block, resident across the K grid axis
    """
    k = pl.program_id(2)

    @pl.when(k == 0)
    def _():
        o_ref[...] = jnp.zeros_like(o_ref)

    o_ref[...] += jnp.dot(a_ref[...], b_ref[...],
                          preferred_element_type=jnp.float32)

    @pl.when(k == pl.num_programs(2) - 1)
    def _():
        o_ref[...] = o_ref[...] * deq_ref[0] + bias_ref[...]


# ---------------------------------------------------------------------------
# im2col (lane-dense NHWC, compute dtype up front, cheap channel pad only)
# ---------------------------------------------------------------------------

def _im2col_nhwc(x, kh, kw, stride, padding, dilation, cpad, dtype,
                 channels_last):
    """-> patches (N*OH*OW, KH*KW*cpad) in `dtype`, plus (OH, OW)."""
    if channels_last:
        n, h, w, c = x.shape
        xb = x.astype(dtype)                                   # already NHWC
    else:
        n, c, h, w = x.shape
        xb = jnp.transpose(x.astype(dtype), (0, 2, 3, 1))      # NHWC, fused cast
    s, p, d = stride, padding, dilation
    oh = (h + 2 * p - d * (kh - 1) - 1) // s + 1
    ow = (w + 2 * p - d * (kw - 1) - 1) // s + 1
    # Spatial pad + (cheap) channel pad on the *small* input, never on the
    # KH*KW-inflated patches tensor.
    xp = jnp.pad(xb, ((0, 0), (p, p), (p, p), (0, cpad - c)))
    taps = []
    for i in range(kh):
        for j in range(kw):
            taps.append(xp[:, i * d: i * d + s * (oh - 1) + 1: s,
                              j * d: j * d + s * (ow - 1) + 1: s, :])
    patches = jnp.stack(taps, axis=3)            # (n, oh, ow, kh*kw, cpad)
    return patches.reshape(n * oh * ow, kh * kw * cpad), oh, ow


# ---------------------------------------------------------------------------
# Forward pass
# ---------------------------------------------------------------------------

def quant_conv2d_pallas(x, weight, bias, *, k_bits, stride=1, padding=0,
                        dilation=1, groups=1, channels_last=False,
                        tm=512, tn=512, tk_target=None):
    """QuantConv2d.forward(x) (bits=None path)."""
    assert groups == 1  # TODO(synk): grouped convolution not implemented in the Pallas path
    oc, cin, kh, kw = weight.shape

    # Integer levels fit exactly in bf16 only for k_bits <= 9; otherwise keep
    # the levels (and activations) in f32 to preserve quantization semantics.
    compute_dtype = jnp.bfloat16 if k_bits <= 9 else jnp.float32
    itemsize = jnp.dtype(compute_dtype).itemsize
    if tk_target is None:
        tk_target = 4608 if compute_dtype == jnp.bfloat16 else 2304

    qmax = 2.0 ** (k_bits - 1) - 1.0
    max_val = jnp.max(jnp.abs(weight)).astype(jnp.float32) + 1e-8  # tiny reduction
    qscale = jnp.reshape(qmax / max_val, (1,)).astype(jnp.float32)  # SMEM scalar
    deq = jnp.reshape(max_val / qmax, (1,)).astype(jnp.float32)     # SMEM scalar

    # --- K (contraction) tiling: never pad the im2col tensor -----------------
    k_raw = kh * kw * cin
    if k_raw <= tk_target:
        cpad = cin                      # single full-K block, no K grid axis work
        tk = kh * kw * cpad
    else:
        # channel tile = multiple of 128 so tk is a 128-multiple that divides K
        ctile = max(_LANE, (tk_target // (kh * kw * _LANE)) * _LANE)
        cpad = _round_up(cin, ctile)
        tk = kh * kw * ctile

    a, oh, ow = _im2col_nhwc(x, kh, kw, stride, padding, dilation, cpad,
                             compute_dtype, channels_last)
    M, K = a.shape
    N = oc
    n_batch = x.shape[0]

    # Weight matrix: (OC, C, KH, KW) -> (KH, KW, Cpad, OC) -> (K, OC), matching
    # the (kh, kw, c)-minor ordering of the im2col K axis. Weights are small,
    # so this (and the optional channel pad) is cheap.
    w_f32 = weight.astype(jnp.float32)
    if cpad != cin:
        w_f32 = jnp.pad(w_f32, ((0, 0), (0, cpad - cin), (0, 0), (0, 0)))
    w_mat = jnp.transpose(w_f32, (2, 3, 1, 0)).reshape(K, N)

    # --- M / N tiling (no padding; partial boundary blocks are non-reduction)
    tm = min(tm, _round_up(M, _SUBLANE))
    tn = N if N <= tn else tn            # tn swallows all of N when OC <= tn
    # Megacore guard (v7x has 2 TensorCores): ensure >= 2 parallel output tiles.
    while (pl.cdiv(M, tm) * pl.cdiv(N, tn)) < 2 and tm > _SUBLANE:
        tm = max(_SUBLANE, _round_up(tm // 2, _SUBLANE))
    gm, gn, gk = pl.cdiv(M, tm), pl.cdiv(N, tn), K // tk   # tk divides K exactly

    if bias is None:
        bias_arr = jnp.zeros((1, N), jnp.float32)
    else:
        bias_arr = bias.astype(jnp.float32).reshape(1, N)

    # 1) Quantize weights to integer levels in the compute dtype (one pass).
    tr = K if K <= 1024 else 512
    b_q = pl.pallas_call(
        _quant_cast_kernel,
        out_shape=jax.ShapeDtypeStruct((K, N), compute_dtype),
        grid=(pl.cdiv(K, tr),),
        in_specs=[pl.BlockSpec(memory_space=pltpu.MemorySpace.SMEM),
                  pl.BlockSpec((tr, N), lambda r: (r, 0))],
        out_specs=pl.BlockSpec((tr, N), lambda r: (r, 0)),
        compiler_params=pltpu.CompilerParams(
            dimension_semantics=("parallel",)),
    )(qscale, w_mat)

    # 2) M/N/K-tiled MXU matmul, in-place f32 accumulation into the output
    #    block, fused dequant-scale + bias epilogue.
    flops = 2 * M * N * K
    bytes_accessed = (a.size * itemsize + b_q.size * itemsize
                      + M * N * 4 + bias_arr.size * 4)
    vmem_est = (2 * (tm * tk + tk * tn) * itemsize   # double-buffered A, B
                + 2 * tm * tn * 4                    # double-buffered f32 out
                + 2 * tn * 4 + 256)                  # bias + scalars
    vmem_limit = min(48 * 1024 * 1024,
                     max(32 * 1024 * 1024, int(vmem_est * 1.5)))

    out = pl.pallas_call(
        _conv_matmul_kernel,
        out_shape=jax.ShapeDtypeStruct((M, N), jnp.float32),
        grid=(gm, gn, gk),
        in_specs=[
            pl.BlockSpec((tm, tk), lambda i, j, k: (i, k)),      # A tile
            pl.BlockSpec((tk, tn), lambda i, j, k: (k, j)),      # B tile
            pl.BlockSpec(memory_space=pltpu.MemorySpace.SMEM),   # dequant scale
            pl.BlockSpec((1, tn), lambda i, j, k: (0, j)),       # bias
        ],
        out_specs=pl.BlockSpec((tm, tn), lambda i, j, k: (i, j)),
        compiler_params=pltpu.CompilerParams(
            dimension_semantics=("parallel", "parallel", "arbitrary"),
            vmem_limit_bytes=vmem_limit),
        cost_estimate=pl.CostEstimate(flops=flops, transcendentals=0,
                                      bytes_accessed=bytes_accessed),
    )(a, b_q, deq, bias_arr)

    out = out.reshape(n_batch, oh, ow, N)            # lane-dense NHWC result
    if channels_last:
        return out                                    # keep NHWC between layers
    # Single layout transpose at the module boundary (PyTorch NCHW convention).
    return jnp.transpose(out, (0, 3, 1, 2))


# ---------------------------------------------------------------------------
# Module equivalent
# ---------------------------------------------------------------------------

class QuantConv2dPallas:
    """JAX/Pallas equivalent of QuantConv2d.forward(input) (bits=None path)."""

    def __init__(self, in_channels, out_channels, kernel_size, stride=1,
                 padding=0, dilation=1, groups=1, bias=False, k_bits=32, *, key):
        assert groups == 1  # TODO(synk): grouped convolution not implemented in the Pallas path
        self.in_channels = in_channels
        self.out_channels = out_channels
        self.kernel_size = (kernel_size, kernel_size)
        self.stride = stride
        self.padding = padding
        self.dilation = dilation
        self.groups = groups
        self.k_bits = k_bits

        # reset_parameters(): uniform(-stdv, stdv), stdv = 1/sqrt(C*KH*KW)
        n = in_channels * kernel_size * kernel_size
        stdv = 1.0 / math.sqrt(n)
        wkey, bkey = jax.random.split(key)
        self.weight = jax.random.uniform(
            wkey, (out_channels, in_channels // groups, kernel_size, kernel_size),
            dtype=jnp.float32, minval=-stdv, maxval=stdv)
        if bias:
            self.bias = jax.random.uniform(
                bkey, (out_channels,), dtype=jnp.float32, minval=-stdv, maxval=stdv)
        else:
            self.bias = None

        self._fwd = jax.jit(functools.partial(
            quant_conv2d_pallas, k_bits=self.k_bits, stride=self.stride,
            padding=self.padding, dilation=self.dilation, groups=self.groups))

    def __call__(self, x):
        return self._fwd(x, self.weight, self.bias)


# ---------------------------------------------------------------------------
# References (plain JAX) for correctness checks
# ---------------------------------------------------------------------------

def _reference_f32(x, weight, bias, k_bits, stride, padding, dilation):
    """Exact f32 QuantConv2d forward."""
    qmax = 2.0 ** (k_bits - 1) - 1.0
    max_val = jnp.max(jnp.abs(weight)) + 1e-8
    w_q = jnp.round(weight * qmax / max_val) * max_val / qmax
    out = lax.conv_general_dilated(
        x, w_q, window_strides=(stride, stride),
        padding=[(padding, padding), (padding, padding)],
        rhs_dilation=(dilation, dilation),
        dimension_numbers=("NCHW", "OIHW", "NCHW"),
        precision=lax.Precision.HIGHEST)
    if bias is not None:
        out = out + bias[None, :, None, None]
    return out


def _reference_bf16_mirror(x, weight, bias, k_bits, stride, padding, dilation):
    """Same bf16-input / f32-accumulate / f32-epilogue numerics as the kernel."""
    qmax = 2.0 ** (k_bits - 1) - 1.0
    max_val = jnp.max(jnp.abs(weight)) + 1e-8
    w_lvl = jnp.round(weight * qmax / max_val).astype(jnp.bfloat16).astype(jnp.float32)
    x_b = x.astype(jnp.bfloat16).astype(jnp.float32)
    out = lax.conv_general_dilated(
        x_b, w_lvl, window_strides=(stride, stride),
        padding=[(padding, padding), (padding, padding)],
        rhs_dilation=(dilation, dilation),
        dimension_numbers=("NCHW", "OIHW", "NCHW"),
        precision=lax.Precision.HIGHEST) * (max_val / qmax)
    if bias is not None:
        out = out + bias[None, :, None, None]
    return out


# ---------------------------------------------------------------------------
# Main
# ---------------------------------------------------------------------------

if __name__ == "__main__":
    key = jax.random.PRNGKey(0)
    xkey, k1, k2, k3 = jax.random.split(key, 4)

    # Small shapes: batch=2, in_channels=4, spatial=16x16, out_channels=8, 3x3.
    x = jax.random.normal(xkey, (2, 4, 16, 16), dtype=jnp.float32)

    configs = [
        dict(k_bits=8, stride=1, padding=1, bias=False, key=k1),   # bf16 path
        dict(k_bits=8, stride=2, padding=1, bias=True, key=k2),    # strided + bias
        dict(k_bits=16, stride=1, padding=1, bias=True, key=k3),   # f32-level path
    ]
    for cfg in configs:
        module = QuantConv2dPallas(in_channels=4, out_channels=8, kernel_size=3,
                                   stride=cfg["stride"], padding=cfg["padding"],
                                   dilation=1, groups=1, bias=cfg["bias"],
                                   k_bits=cfg["k_bits"], key=cfg["key"])
        out = jax.block_until_ready(module(x))

        ref_f32 = _reference_f32(x, module.weight, module.bias, module.k_bits,
                                 module.stride, module.padding, module.dilation)
        assert out.shape == ref_f32.shape, (out.shape, ref_f32.shape)

        if cfg["k_bits"] <= 9:
            # Tight check vs a reference with identical bf16-input numerics.
            ref_bf16 = _reference_bf16_mirror(x, module.weight, module.bias,
                                              module.k_bits, module.stride,
                                              module.padding, module.dilation)
            assert jnp.allclose(out, ref_bf16, atol=1e-4, rtol=1e-4), \
                float(jnp.max(jnp.abs(out - ref_bf16)))
            # Sanity check vs exact f32 semantics (bf16-level tolerance).
            assert jnp.allclose(out, ref_f32, atol=1e-1, rtol=1e-1), \
                float(jnp.max(jnp.abs(out - ref_f32)))
        else:
            # f32-level path: compare against exact module semantics
            # (tolerance covers MXU f32-matmul pass precision / summation order).
            assert jnp.allclose(out, ref_f32, atol=1e-2, rtol=1e-2), \
                float(jnp.max(jnp.abs(out - ref_f32)))

    print("KERNEL_OK")
</pallas_src>

<mosaic_0001>
module attributes {stable_mosaic.version = 11 : i64} {
  func.func @_quant_cast_kernel(%arg0: i32, %arg1: memref<1xf32, #tpu.memory_space<smem>>, %arg2: memref<36x8xf32, #tpu.memory_space<vmem>>, %arg3: memref<36x8xbf16, #tpu.memory_space<vmem>>) attributes {dimension_semantics = [#tpu.dimension_semantics<parallel>], iteration_bounds = array<i64: 1>, scalar_prefetch = 0 : i64, scratch_operands = 0 : i64, tpu.core_type = #tpu.core_type<tc>, window_params = [{transform_indices = @transform_0, window_bounds = array<i64: 1>}, {transform_indices = @transform_1, window_bounds = array<i64: 36, 8>}, {transform_indices = @transform_2, window_bounds = array<i64: 36, 8>}]} {
    %c0 = arith.constant 0 : index
    %c0_0 = arith.constant 0 : index
    %0 = vector.load %arg2[%c0, %c0_0] : memref<36x8xf32, #tpu.memory_space<vmem>>, vector<36x8xf32>
    %c0_1 = arith.constant 0 : index
    %1 = memref.load %arg1[%c0_1] : memref<1xf32, #tpu.memory_space<smem>>
    %2 = vector.broadcast %1 : f32 to vector<36x8xf32>
    %3 = arith.mulf %0, %2 : vector<36x8xf32>
    %4 = math.roundeven %3 : vector<36x8xf32>
    %5 = arith.truncf %4 : vector<36x8xf32> to vector<36x8xbf16>
    %c0_2 = arith.constant 0 : index
    %c0_3 = arith.constant 0 : index
    %6 = vector.load %arg3[%c0_2, %c0_3] : memref<36x8xbf16, #tpu.memory_space<vmem>>, vector<36x8xbf16>
    tpu.vector_store %arg3[%c0_2, %c0_3], %5 {strides = array<i32>} : memref<36x8xbf16, #tpu.memory_space<vmem>>, vector<36x8xbf16>,
    return
  }
  func.func @transform_0(%arg0: i32) -> i32 {
    %c0_i32 = arith.constant 0 : i32
    %c0_i32_0 = arith.constant 0 : i32
    return %c0_i32 : i32
  }
  func.func @transform_1(%arg0: i32) -> (i32, i32) {
    %c0_i32 = arith.constant 0 : i32
    %c0_i32_0 = arith.constant 0 : i32
    return %arg0, %c0_i32 : i32, i32
  }
  func.func @transform_2(%arg0: i32) -> (i32, i32) {
    %c0_i32 = arith.constant 0 : i32
    %c0_i32_0 = arith.constant 0 : i32
    return %arg0, %c0_i32 : i32, i32
  }
}

module attributes {stable_mosaic.version = 11 : i64} {
  func.func @_conv_matmul_kernel(%arg0: i32, %arg1: i32, %arg2: i32, %arg3: memref<256x36xbf16, #tpu.memory_space<vmem>>, %arg4: memref<36x8xbf16, #tpu.memory_space<vmem>>, %arg5: memref<1xf32, #tpu.memory_space<smem>>, %arg6: memref<1x8xf32, #tpu.memory_space<vmem>>, %arg7: memref<256x8xf32, #tpu.memory_space<vmem>>) attributes {dimension_semantics = [#tpu.dimension_semantics<parallel>, #tpu.dimension_semantics<parallel>, #tpu.dimension_semantics<arbitrary>], iteration_bounds = array<i64: 2, 1, 1>, scalar_prefetch = 0 : i64, scratch_operands = 0 : i64, tpu.core_type = #tpu.core_type<tc>, window_params = [{transform_indices = @transform_0, window_bounds = array<i64: 256, 36>}, {transform_indices = @transform_1, window_bounds = array<i64: 36, 8>}, {transform_indices = @transform_2, window_bounds = array<i64: 1>}, {transform_indices = @transform_3, window_bounds = array<i64: 1, 8>}, {transform_indices = @transform_4, window_bounds = array<i64: 256, 8>}]} {
    %c0_i32 = arith.constant 0 : i32
    %0 = arith.cmpi eq, %arg2, %c0_i32 : i32
    %1 = arith.extui %0 : i1 to i32
    %c0_i32_0 = arith.constant 0 : i32
    %2 = arith.cmpi ne, %1, %c0_i32_0 : i32
    scf.if %2 {
      %cst_10 = arith.constant 0.000000e+00 : f32
      %12 = vector.broadcast %cst_10 : f32 to vector<256x8xf32>
      %c0_11 = arith.constant 0 : index
      %c0_12 = arith.constant 0 : index
      %13 = vector.load %arg7[%c0_11, %c0_12] : memref<256x8xf32, #tpu.memory_space<vmem>>, vector<256x8xf32>
      tpu.vector_store %arg7[%c0_11, %c0_12], %12 {strides = array<i32>} : memref<256x8xf32, #tpu.memory_space<vmem>>, vector<256x8xf32>,
    } else {
    }
    %c0 = arith.constant 0 : index
    %c0_1 = arith.constant 0 : index
    %3 = vector.load %arg7[%c0, %c0_1] : memref<256x8xf32, #tpu.memory_space<vmem>>, vector<256x8xf32>
    %c0_2 = arith.constant 0 : index
    %c0_3 = arith.constant 0 : index
    %4 = vector.load %arg3[%c0_2, %c0_3] : memref<256x36xbf16, #tpu.memory_space<vmem>>, vector<256x36xbf16>
    %c0_4 = arith.constant 0 : index
    %c0_5 = arith.constant 0 : index
    %5 = vector.load %arg4[%c0_4, %c0_5] : memref<36x8xbf16, #tpu.memory_space<vmem>>, vector<36x8xbf16>
    %cst = arith.constant dense<0.000000e+00> : vector<256x8xf32>
    %6 = tpu.matmul %4, %5, %cst {dimension_numbers = #tpu.dot_dimension_numbers<[1], [0], [0], [1], [0, 0, 1, 1], [], []>} : vector<256x36xbf16>, vector<36x8xbf16>, vector<256x8xf32> -> vector<256x8xf32>
    %7 = arith.addf %3, %6 : vector<256x8xf32>
    %c0_6 = arith.constant 0 : index
    %c0_7 = arith.constant 0 : index
    %8 = vector.load %arg7[%c0_6, %c0_7] : memref<256x8xf32, #tpu.memory_space<vmem>>, vector<256x8xf32>
    tpu.vector_store %arg7[%c0_6, %c0_7], %7 {strides = array<i32>} : memref<256x8xf32, #tpu.memory_space<vmem>>, vector<256x8xf32>,
    %c0_i32_8 = arith.constant 0 : i32
    %9 = arith.cmpi eq, %arg2, %c0_i32_8 : i32
    %10 = arith.extui %9 : i1 to i32
    %c0_i32_9 = arith.constant 0 : i32
    %11 = arith.cmpi ne, %10, %c0_i32_9 : i32
    scf.if %11 {
      %c0_10 = arith.constant 0 : index
      %c0_11 = arith.constant 0 : index
      %12 = vector.load %arg7[%c0_10, %c0_11] : memref<256x8xf32, #tpu.memory_space<vmem>>, vector<256x8xf32>
      %c0_12 = arith.constant 0 : index
      %13 = memref.load %arg5[%c0_12] : memref<1xf32, #tpu.memory_space<smem>>
      %14 = vector.broadcast %13 : f32 to vector<256x8xf32>
      %15 = arith.mulf %12, %14 : vector<256x8xf32>
      %c0_13 = arith.constant 0 : index
      %c0_14 = arith.constant 0 : index
      %16 = vector.load %arg6[%c0_13, %c0_14] : memref<1x8xf32, #tpu.memory_space<vmem>>, vector<1x8xf32>
      %17 = vector.broadcast %16 : vector<1x8xf32> to vector<256x8xf32>
      %18 = arith.addf %15, %17 : vector<256x8xf32>
      %c0_15 = arith.constant 0 : index
      %c0_16 = arith.constant 0 : index
      %19 = vector.load %arg7[%c0_15, %c0_16] : memref<256x8xf32, #tpu.memory_space<vmem>>, vector<256x8xf32>
      tpu.vector_store %arg7[%c0_15, %c0_16], %18 {strides = array<i32>} : memref<256x8xf32, #tpu.memory_space<vmem>>, vector<256x8xf32>,
    } else {
    }
    return
  }
  func.func @transform_0(%arg0: i32, %arg1: i32, %arg2: i32) -> (i32, i32) {
    %c0_i32 = arith.constant 0 : i32
    return %arg0, %arg2 : i32, i32
  }
  func.func @transform_1(%arg0: i32, %arg1: i32, %arg2: i32) -> (i32, i32) {
    %c0_i32 = arith.constant 0 : i32
    return %arg2, %arg1 : i32, i32
  }
  func.func @transform_2(%arg0: i32, %arg1: i32, %arg2: i32) -> i32 {
    %c0_i32 = arith.constant 0 : i32
    %c0_i32_0 = arith.constant 0 : i32
    return %c0_i32 : i32
  }
  func.func @transform_3(%arg0: i32, %arg1: i32, %arg2: i32) -> (i32, i32) {
    %c0_i32 = arith.constant 0 : i32
    %c0_i32_0 = arith.constant 0 : i32
    return %c0_i32, %arg1 : i32, i32
  }
  func.func @transform_4(%arg0: i32, %arg1: i32, %arg2: i32) -> (i32, i32) {
    %c0_i32 = arith.constant 0 : i32
    return %arg0, %arg1 : i32, i32
  }
}

</mosaic_0001>

<llo_original>
// kernel: quant_conv2d_pallas.2
$region0: #{quant_conv2d_pallas.2}
  #allocation0 [shape = 'u32[]', space=smem, size = 0x4, offset = 0x4, fixed_abs, tag = 'smem constant byte address 0x4 - core index']
  #allocation1 [shape = 'u32[144,128]{1,0:T(1,128)}', space=vmem, size = 0x12000, scoped, tag = 'internal scratch']
  #allocation2 [shape = 'f32[1]{0:T(128)S(6)}', space=smem, size = 0x200, scoped, tag = 'scoped memory for quant_conv2d_pallas.2']
  %s0 = inlined_call_operand.<no memory space> [shape: f32[1], index: 0, kind: input, shape index: {}]
  %s1 = inlined_call_operand.vmem [shape: f32[36,8], index: 1, kind: input, shape index: {}]
  %s2 = inlined_call_operand.vmem [shape: bf16[36,8], index: 2, kind: output, shape index: {}]
  %s3 = sld [smem:[#allocation0]]
  $region18: #{quant_conv2d_pallas.2} parent=0
    _
  %s5 = ssub.s32 1, %s3
  %s6 = scalar_select 0, %s5, %s3
  %7 = sst [smem:[#allocation2]] %s0
  // Predicated region
  $region2: #{quant_conv2d_pallas.2} parent=0 // pred_check
    _
  $region3: #{quant_conv2d_pallas.2} parent=0 // pred_check_branch
    %9 = sbr.rel (0) target = $region5
  $region4: #{quant_conv2d_pallas.2} parent=0 // pred_region
    _
  $region5: #{quant_conv2d_pallas.2} parent=0 // pred_fallthru
    _
  // Predicated region
  $region6: #{quant_conv2d_pallas.2} parent=0 // pred_check
    _
  $region7: #{quant_conv2d_pallas.2} parent=0 // pred_check_branch
    %11 = sbr.rel (0) target = $region9
  $region8: #{quant_conv2d_pallas.2} parent=0 // pred_region
    _
  $region9: #{quant_conv2d_pallas.2} parent=0 // pred_fallthru
    _
  %v12 = vld [vmem:[%s1] sm:$0xff]
  %v13 = vld [vmem:[%s1 + $0x8] sm:$0xff]
  %v14 = vld [vmem:[%s1 + $0x10] sm:$0xff]
  %v15 = vld [vmem:[%s1 + $0x18] sm:$0xff]
  %v16 = vld [vmem:[%s1 + $0x20] sm:$0xf]
  %s17 = sld [smem:[#allocation2]]
  %v18 = vstv %s17
  %v19 = vmul.f32 %v12, %v18
  %v20 = vmul.f32 %v13, %v18
  %v21 = vmul.f32 %v14, %v18
  %v22 = vmul.f32 %v15, %v18
  %v23 = vmul.f32 %v16, %v18
  %v24 = vround.ne.pseudo %v19
  %v25 = vround.ne.pseudo %v20
  %v26 = vround.ne.pseudo %v21
  %v27 = vround.ne.pseudo %v22
  %v28 = vround.ne.pseudo %v23
  %v29 = vpack.c.bf16 %v25, %v24
  %v30 = vpack.c.bf16 %v27, %v26
  %v31 = vpack.c.bf16 %v28, %v28
  %v35 = vunpack.c.l.b16 %v29
  %v36 = vunpack.c.h.b16 %v29
  %v37 = vunpack.c.l.b16 %v30
  %v38 = vunpack.c.h.b16 %v30
  %v39 = vunpack.c.l.b16 %v31
  %v40 = vpack.c.b16 %v35, %v35
  %v41 = vpack.c.b16 %v36, %v36
  %v42 = vpack.c.b16 %v37, %v37
  %v43 = vpack.c.b16 %v38, %v38
  %v44 = vpack.c.b16 %v39, %v39
  %vm50 = vcmask 60416
  %51 = vst.msk [vmem:[%s2] sm:$0xf] %vm50, %v40
  %52 = vst.msk [vmem:[%s2 + $0x4] sm:$0xf] %vm50, %v41
  %53 = vst.msk [vmem:[%s2 + $0x8] sm:$0xf] %vm50, %v42
  %54 = vst.msk [vmem:[%s2 + $0xc] sm:$0xf] %vm50, %v43
  %vm55 = vcmask 58368
  %56 = vst.msk [vmem:[%s2 + $0x10] sm:$0x3] %vm55, %v44
  // Predicated region
  $region10: #{quant_conv2d_pallas.2} parent=0 // pred_check
    _
  $region11: #{quant_conv2d_pallas.2} parent=0 // pred_check_branch
    %58 = sbr.rel (0) target = $region13
  $region12: #{quant_conv2d_pallas.2} parent=0 // pred_region
    _
  $region13: #{quant_conv2d_pallas.2} parent=0 // pred_fallthru
    _
  // Predicated region
  $region14: #{quant_conv2d_pallas.2} parent=0 // pred_check
    _
  $region15: #{quant_conv2d_pallas.2} parent=0 // pred_check_branch
    %60 = sbr.rel (0) target = $region17
  $region16: #{quant_conv2d_pallas.2} parent=0 // pred_region
    _
  $region17: #{quant_conv2d_pallas.2} parent=0 // pred_fallthru
    _

// kernel: quant_conv2d_pallas.3
$region0: #{quant_conv2d_pallas.3}
  #allocation0 [shape = 'u32[]', space=smem, size = 0x4, offset = 0x4, fixed_abs, tag = 'smem constant byte address 0x4 - core index']
  #allocation1 [shape = 'u32[144,128]{1,0:T(1,128)}', space=vmem, size = 0x12000, scoped, tag = 'internal scratch']
  #allocation2 [shape = 'f32[1]{0:T(128)S(6)}', space=smem, size = 0x200, scoped, tag = 'scoped memory for quant_conv2d_pallas.3']
  %s0 = inlined_call_operand.vmem [shape: bf16[512,36], index: 0, kind: input, shape index: {}]
  %s1 = inlined_call_operand.vmem [shape: bf16[36,8], index: 1, kind: input, shape index: {}]
  %s2 = inlined_call_operand.<no memory space> [shape: f32[1], index: 2, kind: input, shape index: {}]
  %s3 = inlined_call_operand.vmem [shape: f32[1,8], index: 3, kind: input, shape index: {}]
  %s4 = inlined_call_operand.vmem [shape: f32[512,8], index: 4, kind: output, shape index: {}]
  %s5 = sld [smem:[#allocation0]]
  $region57: #{quant_conv2d_pallas.3} parent=0
    _
  %s7 = ssub.s32 1, %s5
  %s8 = scalar_select 0, %s7, %s5
  %9 = sst [smem:[#allocation2]] %s2
  loop: start=0, step=1, limit=4
  $region2: #{quant_conv2d_pallas.3} parent=0 // loop_pre_header
    _
  $region3: #{quant_conv2d_pallas.3} parent=0 // loop_header
    %s11 = sphi 0, %s15
    %p12 = scmp.ge.s32.totalorder %s11, 4
    %s18 = sphi 0, %s37
    %s19 = sphi 0, %s33
    %s20 = sphi 0, %s29
    %s21 = sphi 0, %s18
    %s22 = sphi 0, %s19
    %s23 = sphi 0, %s20
    %s24 = sphi 0, %s21
    %s25 = sphi 0, %s22
    %s26 = sphi 0, %s23
    %s42 = sphi 0, %s44
    %s45 = sphi 0, %s42
    %s46 = sphi 0, %s45
    %s62 = sphi 0, %s46
    %s70 = sphi 0, %s72
    %s73 = sphi 0, %s70
    %s74 = sphi 0, %s73
    %s90 = sphi 0, %s74
    %s94 = sphi 0, %s94
    %s96 = sphi 0, %s94
    %s97 = sphi 0, %s96
    %s111 = sphi 0, %s97
    %s117 = sphi 0, %s119
    %s120 = sphi 0, %s117
    %s121 = sphi 0, %s120
    %s137 = sphi 0, %s121
    %s145 = sphi 0, %s147
    %s148 = sphi 0, %s145
    %s149 = sphi 0, %s148
    %s165 = sphi 0, %s149
  $region4: #{quant_conv2d_pallas.3} parent=0 // loop_header_branch
    %14 = sbr.rel (%p12) target = $region8
  $region5: #{quant_conv2d_pallas.3} parent=0 // loop_body
    %s16 = ssub.s32 %s11, 1
    %s17 = ssub.s32 %s11, 2
    %s27 = sadd.s32 1, %s20
    %p28 = scmp.ge.s32.totalorder %s27, 1
    %s29 = scalar_select %p28, 0, %s27
    %s30 = sadd.s32 1, %s19
    %s31 = scalar_select %p28, %s30, %s19
    %p32 = scmp.ge.s32.totalorder %s31, 1
    %s33 = scalar_select %p32, 0, %s31
    %s34 = sadd.s32 1, %s18
    %s35 = scalar_select %p32, %s34, %s18
    %p36 = scmp.ge.s32.totalorder %s35, 2
    %s37 = scalar_select %p36, 0, %s35
    %s38 = ssub.s32 %s18, %s37
    %s39 = ssub.s32 %s20, %s29
    %s40 = sor.u32 %s38, %s39
    %p41 = scmp.eq.s32.totalorder %s40, 0
    %s43 = sadd.s32 %s42, 1
    %s44 = scalar_select %p41, %s42, %s43
    %p47 = pneg %p41
    %p48 = scmp.eq.s32.totalorder %s11, 1
    %p49 = por %p47, %p48
    %p50 = scmp.ne.s32.totalorder %s42, %s45
    %p51 = scmp.eq.s32.totalorder %s11, 0
    %p52 = por %p50, %p51
    %p53 = scmp.ne.s32.totalorder %s42, %s45
    %p54 = scmp.eq.s32.totalorder %s16, 1
    %p55 = por %p53, %p54
    %p56 = scmp.ne.s32.totalorder %s45, %s46
    %p57 = scmp.eq.s32.totalorder %s16, 0
    %p58 = por %p56, %p57
    %p59 = scmp.ne.s32.totalorder %s45, %s46
    %p60 = scmp.eq.s32.totalorder %s17, 1
    %p61 = por %p59, %p60
    %p63 = scmp.ne.s32.totalorder %s46, %s62
    %p64 = scmp.eq.s32.totalorder %s17, 0
    %p65 = por %p63, %p64
    %s66 = ssub.s32 %s20, %s29
    %s67 = ssub.s32 %s19, %s33
    %s68 = sor.u32 %s66, %s67
    %p69 = scmp.eq.s32.totalorder %s68, 0
    %s71 = sadd.s32 %s70, 1
    %s72 = scalar_select %p69, %s70, %s71
    %p75 = pneg %p69
    %p76 = scmp.eq.s32.totalorder %s11, 1
    %p77 = por %p75, %p76
    %p78 = scmp.ne.s32.totalorder %s70, %s73
    %p79 = scmp.eq.s32.totalorder %s11, 0
    %p80 = por %p78, %p79
    %p81 = scmp.ne.s32.totalorder %s70, %s73
    %p82 = scmp.eq.s32.totalorder %s16, 1
    %p83 = por %p81, %p82
    %p84 = scmp.ne.s32.totalorder %s73, %s74
    %p85 = scmp.eq.s32.totalorder %s16, 0
    %p86 = por %p84, %p85
    %p87 = scmp.ne.s32.totalorder %s73, %s74
    %p88 = scmp.eq.s32.totalorder %s17, 1
    %p89 = por %p87, %p88
    %p91 = scmp.ne.s32.totalorder %s74, %s90
    %p92 = scmp.eq.s32.totalorder %s17, 0
    %p93 = por %p91, %p92
    %s95 = sadd.s32 %s94, 1
    %p98 = scmp.eq.s32.totalorder %s11, 1
    %p99 = scmp.ne.s32.totalorder %s94, %s96
    %p100 = scmp.eq.s32.totalorder %s11, 0
    %p101 = por %p99, %p100
    %p102 = scmp.ne.s32.totalorder %s94, %s96
    %p103 = scmp.eq.s32.totalorder %s16, 1
    %p104 = por %p102, %p103
    %p105 = scmp.ne.s32.totalorder %s96, %s97
    %p106 = scmp.eq.s32.totalorder %s16, 0
    %p107 = por %p105, %p106
    %p108 = scmp.ne.s32.totalorder %s96, %s97
    %p109 = scmp.eq.s32.totalorder %s17, 1
    %p110 = por %p108, %p109
    %p112 = scmp.ne.s32.totalorder %s97, %s111
    %p113 = scmp.eq.s32.totalorder %s17, 0
    %p114 = por %p112, %p113
    %s115 = ssub.s32 %s19, %s33
    %p116 = scmp.eq.s32.totalorder %s115, 0
    %s118 = sadd.s32 %s117, 1
    %s119 = scalar_select %p116, %s117, %s118
    %p122 = pneg %p116
    %p123 = scmp.eq.s32.totalorder %s11, 1
    %p124 = por %p122, %p123
    %p125 = scmp.ne.s32.totalorder %s117, %s120
    %p126 = scmp.eq.s32.totalorder %s11, 0
    %p127 = por %p125, %p126
    %p128 = scmp.ne.s32.totalorder %s117, %s120
    %p129 = scmp.eq.s32.totalorder %s16, 1
    %p130 = por %p128, %p129
    %p131 = scmp.ne.s32.totalorder %s120, %s121
    %p132 = scmp.eq.s32.totalorder %s16, 0
    %p133 = por %p131, %p132
    %p134 = scmp.ne.s32.totalorder %s120, %s121
    %p135 = scmp.eq.s32.totalorder %s17, 1
    %p136 = por %p134, %p135
    %p138 = scmp.ne.s32.totalorder %s121, %s137
    %p139 = scmp.eq.s32.totalorder %s17, 0
    %p140 = por %p138, %p139
    %s141 = ssub.s32 %s18, %s37
    %s142 = ssub.s32 %s19, %s33
    %s143 = sor.u32 %s141, %s142
    %p144 = scmp.eq.s32.totalorder %s143, 0
    %s146 = sadd.s32 %s145, 1
    %s147 = scalar_select %p144, %s145, %s146
    %p150 = pneg %p144
    %p151 = scmp.eq.s32.totalorder %s11, 1
    %p152 = por %p150, %p151
    %p153 = scmp.ne.s32.totalorder %s145, %s148
    %p154 = scmp.eq.s32.totalorder %s11, 0
    %p155 = por %p153, %p154
    %p156 = scmp.ne.s32.totalorder %s145, %s148
    %p157 = scmp.eq.s32.totalorder %s16, 1
    %p158 = por %p156, %p157
    %p159 = scmp.ne.s32.totalorder %s148, %s149
    %p160 = scmp.eq.s32.totalorder %s16, 0
    %p161 = por %p159, %p160
    %p162 = scmp.ne.s32.totalorder %s148, %s149
    %p163 = scmp.eq.s32.totalorder %s17, 1
    %p164 = por %p162, %p163
    %p166 = scmp.ne.s32.totalorder %s149, %s165
    %p167 = scmp.eq.s32.totalorder %s17, 0
    %p168 = por %p166, %p167
    %p169 = scmp.le.s32.totalorder 1, %s11
    %p170 = scmp.lt.s32.totalorder %s11, 3
    %p171 = pnand %p169, %p170
    %p172 = pneg %p171
    // Predicated region
    $region9: #{quant_conv2d_pallas.3} parent=5 // pred_check
      _
    $region10: #{quant_conv2d_pallas.3} parent=5 // pred_check_branch
      %174 = sbr.rel (%p171) target = $region12
    $region11: #{quant_conv2d_pallas.3} parent=5 // pred_region
      %s175 = ssub.s32 %s11, 1
      // Predicated region
      $region13: #{quant_conv2d_pallas.3} parent=11 // pred_check
        %p176 = pneg %p86
      $region14: #{quant_conv2d_pallas.3} parent=11 // pred_check_branch
        %178 = sbr.rel (%p176) target = $region16
      $region15: #{quant_conv2d_pallas.3} parent=11 // pred_region
        %s179 = smul.u32 5, %s23
        %p180 = scmp.lt.s32.totalorder %s179, 4
        %s181 = scalar_select %p180, %s179, 4
        %p182 = scmp.lt.s32.totalorder %s22, 0
        %s183 = scalar_select %p182, %s22, 0
        %s184 = sadd.s32 %s183, %s181
        %s185 = smul.addr %s184, 4
        %s186 = scalar_lea.vmem %s1, %s185
        %s187 = smul.u32 5, %s23
      $region16: #{quant_conv2d_pallas.3} parent=11 // pred_fallthru
        _
      // Predicated region
      $region17: #{quant_conv2d_pallas.3} parent=11 // pred_check
        %p188 = pneg %p107
      $region18: #{quant_conv2d_pallas.3} parent=11 // pred_check_branch
        %190 = sbr.rel (%p188) target = $region20
      $region19: #{quant_conv2d_pallas.3} parent=11 // pred_region
        _
      $region20: #{quant_conv2d_pallas.3} parent=11 // pred_fallthru
        _
      // Predicated region
      $region21: #{quant_conv2d_pallas.3} parent=11 // pred_check
        %p191 = pneg %p133
      $region22: #{quant_conv2d_pallas.3} parent=11 // pred_check_branch
        %193 = sbr.rel (%p191) target = $region24
      $region23: #{quant_conv2d_pallas.3} parent=11 // pred_region
        %p194 = scmp.lt.s32.totalorder %s22, 0
        %s195 = scalar_select %p194, %s22, 0
        %s196 = scalar_lea.vmem %s3, %s195
      $region24: #{quant_conv2d_pallas.3} parent=11 // pred_fallthru
        _
    $region12: #{quant_conv2d_pallas.3} parent=5 // pred_fallthru
      _
    %p197 = scmp.lt.s32.totalorder %s11, 2
    // Predicated region
    $region25: #{quant_conv2d_pallas.3} parent=5 // pred_check
      %p198 = pneg %p197
    $region26: #{quant_conv2d_pallas.3} parent=5 // pred_check_branch
      %200 = sbr.rel (%p198) target = $region28
    $region27: #{quant_conv2d_pallas.3} parent=5 // pred_region
      // Predicated region
      $region29: #{quant_conv2d_pallas.3} parent=27 // pred_check
        %p201 = pneg %p52
      $region30: #{quant_conv2d_pallas.3} parent=27 // pred_check_branch
        %203 = sbr.rel (%p201) target = $region32
      $region31: #{quant_conv2d_pallas.3} parent=27 // pred_region
        %s204 = smul.u32 32, %s18
        %p205 = scmp.lt.s32.totalorder %s204, 63
        %s206 = scalar_select %p205, %s204, 63
        %p207 = scmp.lt.s32.totalorder %s20, 0
        %s208 = scalar_select %p207, %s20, 0
        %s209 = sadd.s32 %s208, %s206
        %s210 = smul.addr %s209, 4
        %s211 = scalar_lea.vmem %s0, %s210
        %s212 = smul.u32 32, %s18
      $region32: #{quant_conv2d_pallas.3} parent=27 // pred_fallthru
        _
    $region28: #{quant_conv2d_pallas.3} parent=5 // pred_fallthru
      _
    %p213 = scmp.le.s32.totalorder 1, %s11
    %p214 = scmp.lt.s32.totalorder %s11, 3
    %p215 = pnand %p213, %p214
    %p216 = pneg %p215
    // Predicated region
    $region33: #{quant_conv2d_pallas.3} parent=5 // pred_check
      _
    $region34: #{quant_conv2d_pallas.3} parent=5 // pred_check_branch
      %218 = sbr.rel (%p215) target = $region36
    $region35: #{quant_conv2d_pallas.3} parent=5 // pred_region
      %s219 = ssub.s32 %s11, 1
      %s220 = smul.u32 32, %s21
      %p221 = scmp.lt.s32.totalorder %s220, 63
      %s222 = scalar_select %p221, %s220, 63
      %p223 = scmp.lt.s32.totalorder %s23, 0
      %s224 = scalar_select %p223, %s23, 0
      %s225 = sadd.s32 %s224, %s222
      %s226 = smul.addr %s225, 4
      %s227 = scalar_lea.vmem %s0, %s226
      %p228 = pneg %p58
      %p229 = pneg %p55
      %s230 = smul.u32 5, %s23
      %p231 = scmp.lt.s32.totalorder %s230, 4
      %s232 = scalar_select %p231, %s230, 4
      %p233 = scmp.lt.s32.totalorder %s22, 0
      %s234 = scalar_select %p233, %s22, 0
      %s235 = sadd.s32 %s234, %s232
      %s236 = smul.addr %s235, 4
      %s237 = scalar_lea.vmem %s1, %s236
      %p238 = pneg %p86
      %p239 = pneg %p83
      %p240 = pneg %p107
      %p241 = pneg %p104
      %p242 = scmp.lt.s32.totalorder %s22, 0
      %s243 = scalar_select %p242, %s22, 0
      %s244 = scalar_lea.vmem %s3, %s243
      %p245 = pneg %p133
      %p246 = pneg %p130
      %p247 = pneg %p161
      %p248 = pneg %p158
      %s249 = smul.u32 32, %s21
      %p250 = scmp.lt.s32.totalorder %s249, 63
      %s251 = scalar_select %p250, %s249, 63
      %p252 = scmp.lt.s32.totalorder %s22, 0
      %s253 = scalar_select %p252, %s22, 0
      %s254 = sadd.s32 %s253, %s251
      %s255 = smul.addr %s254, 8
      %s256 = scalar_lea.vmem %s4, %s255
      %s257 = smul.u32 32, %s21
      %p258 = scmp.lt.s32.totalorder %s257, 63
      %s259 = scalar_select %p258, %s257, 63
      %p260 = scmp.lt.s32.totalorder %s23, 0
      %s261 = scalar_select %p260, %s23, 0
      %s262 = sadd.s32 %s261, %s259
      %s263 = smul.addr %s262, 4
      %s264 = scalar_lea.vmem %s0, %s263
      %s265 = smul.u32 32, %s21
      %s266 = smul.u32 5, %s23
      %p267 = scmp.lt.s32.totalorder %s266, 4
      %s268 = scalar_select %p267, %s266, 4
      %p269 = scmp.lt.s32.totalorder %s22, 0
      %s270 = scalar_select %p269, %s22, 0
      %s271 = sadd.s32 %s270, %s268
      %s272 = smul.addr %s271, 4
      %s273 = scalar_lea.vmem %s1, %s272
      %s274 = smul.u32 5, %s23
      %p275 = scmp.lt.s32.totalorder %s22, 0
      %s276 = scalar_select %p275, %s22, 0
      %s277 = scalar_lea.vmem %s3, %s276
      %s278 = smul.u32 32, %s21
      %p279 = scmp.lt.s32.totalorder %s278, 63
      %s280 = scalar_select %p279, %s278, 63
      %p281 = scmp.lt.s32.totalorder %s22, 0
      %s282 = scalar_select %p281, %s22, 0
      %s283 = sadd.s32 %s282, %s280
      %s284 = smul.addr %s283, 8
      %s285 = scalar_lea.vmem %s4, %s284
      %s286 = smul.u32 32, %s21
      %p288 = scmp.eq.s32.totalorder %s23, 0
      // Predicated region
      $region37: #{quant_conv2d_pallas.3} parent=35 // pred_check
        %p289 = pneg %p288
      $region38: #{quant_conv2d_pallas.3} parent=35 // pred_check_branch
        %291 = sbr.rel (%p289) target = $region40
      $region39: #{quant_conv2d_pallas.3} parent=35 // pred_region
        %vm292 = vcmask 64512
        %293 = vst.msk [vmem:[%s285] sm:$0xff] %vm292, 0.0
        %294 = vst.msk [vmem:[%s285 + $0x8] sm:$0xff] %vm292, 0.0
        %295 = vst.msk [vmem:[%s285 + $0x10] sm:$0xff] %vm292, 0.0
        %296 = vst.msk [vmem:[%s285 + $0x18] sm:$0xff] %vm292, 0.0
        %297 = vst.msk [vmem:[%s285 + $0x20] sm:$0xff] %vm292, 0.0
        %298 = vst.msk [vmem:[%s285 + $0x28] sm:$0xff] %vm292, 0.0
        %299 = vst.msk [vmem:[%s285 + $0x30] sm:$0xff] %vm292, 0.0
        %300 = vst.msk [vmem:[%s285 + $0x38] sm:$0xff] %vm292, 0.0
        %301 = vst.msk [vmem:[%s285 + $0x40] sm:$0xff] %vm292, 0.0
        %302 = vst.msk [vmem:[%s285 + $0x48] sm:$0xff] %vm292, 0.0
        %303 = vst.msk [vmem:[%s285 + $0x50] sm:$0xff] %vm292, 0.0
        %304 = vst.msk [vmem:[%s285 + $0x58] sm:$0xff] %vm292, 0.0
        %305 = vst.msk [vmem:[%s285 + $0x60] sm:$0xff] %vm292, 0.0
        %306 = vst.msk [vmem:[%s285 + $0x68] sm:$0xff] %vm292, 0.0
        %307 = vst.msk [vmem:[%s285 + $0x70] sm:$0xff] %vm292, 0.0
        %308 = vst.msk [vmem:[%s285 + $0x78] sm:$0xff] %vm292, 0.0
        %309 = vst.msk [vmem:[%s285 + $0x80] sm:$0xff] %vm292, 0.0
        %310 = vst.msk [vmem:[%s285 + $0x88] sm:$0xff] %vm292, 0.0
        %311 = vst.msk [vmem:[%s285 + $0x90] sm:$0xff] %vm292, 0.0
        %312 = vst.msk [vmem:[%s285 + $0x98] sm:$0xff] %vm292, 0.0
        %313 = vst.msk [vmem:[%s285 + $0xa0] sm:$0xff] %vm292, 0.0
        %314 = vst.msk [vmem:[%s285 + $0xa8] sm:$0xff] %vm292, 0.0
        %315 = vst.msk [vmem:[%s285 + $0xb0] sm:$0xff] %vm292, 0.0
        %316 = vst.msk [vmem:[%s285 + $0xb8] sm:$0xff] %vm292, 0.0
        %317 = vst.msk [vmem:[%s285 + $0xc0] sm:$0xff] %vm292, 0.0
        %318 = vst.msk [vmem:[%s285 + $0xc8] sm:$0xff] %vm292, 0.0
        %319 = vst.msk [vmem:[%s285 + $0xd0] sm:$0xff] %vm292, 0.0
        %320 = vst.msk [vmem:[%s285 + $0xd8] sm:$0xff] %vm292, 0.0
        %321 = vst.msk [vmem:[%s285 + $0xe0] sm:$0xff] %vm292, 0.0
        %322 = vst.msk [vmem:[%s285 + $0xe8] sm:$0xff] %vm292, 0.0
        %323 = vst.msk [vmem:[%s285 + $0xf0] sm:$0xff] %vm292, 0.0
        %324 = vst.msk [vmem:[%s285 + $0xf8] sm:$0xff] %vm292, 0.0
      $region40: #{quant_conv2d_pallas.3} parent=35 // pred_fallthru
        _
      %v325 = vld [vmem:[%s285] sm:$0xff]
      %v326 = vld [vmem:[%s285 + $0x8] sm:$0xff]
      %v327 = vld [vmem:[%s285 + $0x10] sm:$0xff]
      %v328 = vld [vmem:[%s285 + $0x18] sm:$0xff]
      %v329 = vld [vmem:[%s285 + $0x20] sm:$0xff]
      %v330 = vld [vmem:[%s285 + $0x28] sm:$0xff]
      %v331 = vld [vmem:[%s285 + $0x30] sm:$0xff]
      %v332 = vld [vmem:[%s285 + $0x38] sm:$0xff]
      %v333 = vld [vmem:[%s285 + $0x40] sm:$0xff]
      %v334 = vld [vmem:[%s285 + $0x48] sm:$0xff]
      %v335 = vld [vmem:[%s285 + $0x50] sm:$0xff]
      %v336 = vld [vmem:[%s285 + $0x58] sm:$0xff]
      %v337 = vld [vmem:[%s285 + $0x60] sm:$0xff]
      %v338 = vld [vmem:[%s285 + $0x68] sm:$0xff]
      %v339 = vld [vmem:[%s285 + $0x70] sm:$0xff]
      %v340 = vld [vmem:[%s285 + $0x78] sm:$0xff]
      %v341 = vld [vmem:[%s285 + $0x80] sm:$0xff]
      %v342 = vld [vmem:[%s285 + $0x88] sm:$0xff]
      %v343 = vld [vmem:[%s285 + $0x90] sm:$0xff]
      %v344 = vld [vmem:[%s285 + $0x98] sm:$0xff]
      %v345 = vld [vmem:[%s285 + $0xa0] sm:$0xff]
      %v346 = vld [vmem:[%s285 + $0xa8] sm:$0xff]
      %v347 = vld [vmem:[%s285 + $0xb0] sm:$0xff]
      %v348 = vld [vmem:[%s285 + $0xb8] sm:$0xff]
      %v349 = vld [vmem:[%s285 + $0xc0] sm:$0xff]
      %v350 = vld [vmem:[%s285 + $0xc8] sm:$0xff]
      %v351 = vld [vmem:[%s285 + $0xd0] sm:$0xff]
      %v352 = vld [vmem:[%s285 + $0xd8] sm:$0xff]
      %v353 = vld [vmem:[%s285 + $0xe0] sm:$0xff]
      %v354 = vld [vmem:[%s285 + $0xe8] sm:$0xff]
      %v355 = vld [vmem:[%s285 + $0xf0] sm:$0xff]
      %v356 = vld [vmem:[%s285 + $0xf8] sm:$0xff]
      %v357 = vld [vmem:[%s264] sm:$0xf]
      %v358 = vld [vmem:[%s264 + $0x4] sm:$0xf]
      %v359 = vld [vmem:[%s264 + $0x8] sm:$0xf]
      %v360 = vld [vmem:[%s264 + $0xc] sm:$0xf]
      %v361 = vld [vmem:[%s264 + $0x10] sm:$0xf]
      %v362 = vld [vmem:[%s264 + $0x14] sm:$0xf]
      %v363 = vld [vmem:[%s264 + $0x18] sm:$0xf]
      %v364 = vld [vmem:[%s264 + $0x1c] sm:$0xf]
      %v365 = vld [vmem:[%s264 + $0x20] sm:$0xf]
      %v366 = vld [vmem:[%s264 + $0x24] sm:$0xf]
      %v367 = vld [vmem:[%s264 + $0x28] sm:$0xf]
      %v368 = vld [vmem:[%s264 + $0x2c] sm:$0xf]
      %v369 = vld [vmem:[%s264 + $0x30] sm:$0xf]
      %v370 = vld [vmem:[%s264 + $0x34] sm:$0xf]
      %v371 = vld [vmem:[%s264 + $0x38] sm:$0xf]
      %v372 = vld [vmem:[%s264 + $0x3c] sm:$0xf]
      %v373 = vld [vmem:[%s264 + $0x40] sm:$0xf]
      %v374 = vld [vmem:[%s264 + $0x44] sm:$0xf]
      %v375 = vld [vmem:[%s264 + $0x48] sm:$0xf]
      %v376 = vld [vmem:[%s264 + $0x4c] sm:$0xf]
      %v377 = vld [vmem:[%s264 + $0x50] sm:$0xf]
      %v378 = vld [vmem:[%s264 + $0x54] sm:$0xf]
      %v379 = vld [vmem:[%s264 + $0x58] sm:$0xf]
      %v380 = vld [vmem:[%s264 + $0x5c] sm:$0xf]
      %v381 = vld [vmem:[%s264 + $0x60] sm:$0xf]
      %v382 = vld [vmem:[%s264 + $0x64] sm:$0xf]
      %v383 = vld [vmem:[%s264 + $0x68] sm:$0xf]
      %v384 = vld [vmem:[%s264 + $0x6c] sm:$0xf]
      %v385 = vld [vmem:[%s264 + $0x70] sm:$0xf]
      %v386 = vld [vmem:[%s264 + $0x74] sm:$0xf]
      %v387 = vld [vmem:[%s264 + $0x78] sm:$0xf]
      %v388 = vld [vmem:[%s264 + $0x7c] sm:$0xf]
      %v389 = vld [vmem:[%s273] sm:$0xf]
      %v390 = vld [vmem:[%s273 + $0x4] sm:$0xf]
      %v391 = vld [vmem:[%s273 + $0x8] sm:$0xf]
      %v392 = vld [vmem:[%s273 + $0xc] sm:$0xf]
      %v393 = vld [vmem:[%s273 + $0x10] sm:$0x3]
      %v426 = vunpack.c.l.b16 %v357
      %v427 = vunpack.c.l.b16 %v358
      %v428 = vunpack.c.l.b16 %v359
      %v429 = vunpack.c.l.b16 %v360
      %v430 = vunpack.c.l.b16 %v361
      %v431 = vunpack.c.l.b16 %v362
      %v432 = vunpack.c.l.b16 %v363
      %v433 = vunpack.c.l.b16 %v364
      %v434 = vunpack.c.l.b16 %v365
      %v435 = vunpack.c.l.b16 %v366
      %v436 = vunpack.c.l.b16 %v367
      %v437 = vunpack.c.l.b16 %v368
      %v438 = vunpack.c.l.b16 %v369
      %v439 = vunpack.c.l.b16 %v370
      %v440 = vunpack.c.l.b16 %v371
      %v441 = vunpack.c.l.b16 %v372
      %v442 = vunpack.c.l.b16 %v373
      %v443 = vunpack.c.l.b16 %v374
      %v444 = vunpack.c.l.b16 %v375
      %v445 = vunpack.c.l.b16 %v376
      %v446 = vunpack.c.l.b16 %v377
      %v447 = vunpack.c.l.b16 %v378
      %v448 = vunpack.c.l.b16 %v379
      %v449 = vunpack.c.l.b16 %v380
      %v450 = vunpack.c.l.b16 %v381
      %v451 = vunpack.c.l.b16 %v382
      %v452 = vunpack.c.l.b16 %v383
      %v453 = vunpack.c.l.b16 %v384
      %v454 = vunpack.c.l.b16 %v385
      %v455 = vunpack.c.l.b16 %v386
      %v456 = vunpack.c.l.b16 %v387
      %v457 = vunpack.c.l.b16 %v388
      %v458 = vpack.c.b16 %v427, %v426
      %v459 = vpack.c.b16 %v429, %v428
      %v460 = vpack.c.b16 %v431, %v430
      %v461 = vpack.c.b16 %v433, %v432
      %v462 = vpack.c.b16 %v435, %v434
      %v463 = vpack.c.b16 %v437, %v436
      %v464 = vpack.c.b16 %v439, %v438
      %v465 = vpack.c.b16 %v441, %v440
      %v466 = vpack.c.b16 %v443, %v442
      %v467 = vpack.c.b16 %v445, %v444
      %v468 = vpack.c.b16 %v447, %v446
      %v469 = vpack.c.b16 %v449, %v448
      %v470 = vpack.c.b16 %v451, %v450
      %v471 = vpack.c.b16 %v453, %v452
      %v472 = vpack.c.b16 %v455, %v454
      %v473 = vpack.c.b16 %v457, %v456
      %v479 = vunpack.c.l.b16 %v389
      %v480 = vunpack.c.l.b16 %v390
      %v481 = vunpack.c.l.b16 %v391
      %v482 = vunpack.c.l.b16 %v392
      %v483 = vunpack.c.l.b16 %v393
      %v484 = vpack.c.b16 %v480, %v479
      %v485 = vpack.c.b16 %v482, %v481
      %v486 = vpack.c.b16 %v483, %v483
      %vm489 = vcmask 293888
      %v491 = vsel %vm489, %v458, 0
      %v494 = vsel %vm489, %v459, 0
      %v497 = vsel %vm489, %v460, 0
      %v500 = vsel %vm489, %v461, 0
      %v503 = vsel %vm489, %v462, 0
      %v506 = vsel %vm489, %v463, 0
      %v509 = vsel %vm489, %v464, 0
      %v512 = vsel %vm489, %v465, 0
      %v515 = vsel %vm489, %v466, 0
      %v518 = vsel %vm489, %v467, 0
      %v521 = vsel %vm489, %v468, 0
      %v524 = vsel %vm489, %v469, 0
      %v527 = vsel %vm489, %v470, 0
      %v530 = vsel %vm489, %v471, 0
      %v533 = vsel %vm489, %v472, 0
      %v536 = vsel %vm489, %v473, 0
      %vm538 = vcmask 1041408
      %v540 = vsel %vm538, %v486, 0
      %542 = vmatprep.subr.bf16.mxu0 0
      %543 = vmatpush1.bf16.msra.mxu0 %v484
      %544 = vmatprep.subr.bf16.mxu0 0
      %545 = vmatpush1.bf16.msra.mxu0 %v485
      %546 = vmatprep.subr.bf16.mxu0 0
      %547 = vmatpush1.bf16.msra.mxu0 %v540
      %548 = vmatprep.subr.bf16.mxu0 0
      %549 = vmatpush1.bf16.msra.mxu0 0
      %550 = vmatprep.subr.bf16.mxu0 0
      %551 = vmatpush1.bf16.msra.mxu0 0
      %552 = vmatprep.subr.bf16.mxu0 0
      %553 = vmatpush1.bf16.msra.mxu0 0
      %554 = vmatprep.subr.bf16.mxu0 0
      %555 = vmatpush1.bf16.msra.mxu0 0
      %556 = vmatprep.subr.bf16.mxu0 0
      %557 = vmatpush1.bf16.msra.mxu0 0
      %558 = vmatprep.subr.bf16.mxu0 0
      %559 = vmatpush1.bf16.msra.mxu0 0
      %560 = vmatprep.subr.bf16.mxu0 0
      %561 = vmatpush1.bf16.msra.mxu0 0
      %562 = vmatprep.subr.bf16.mxu0 0
      %563 = vmatpush1.bf16.msra.mxu0 0
      %564 = vmatprep.subr.bf16.mxu0 0
      %565 = vmatpush1.bf16.msra.mxu0 0
      %566 = vmatprep.subr.bf16.mxu0 0
      %567 = vmatpush1.bf16.msra.mxu0 0
      %568 = vmatprep.subr.bf16.mxu0 0
      %569 = vmatpush1.bf16.msra.mxu0 0
      %570 = vmatprep.subr.bf16.mxu0 0
      %571 = vmatpush1.bf16.msra.mxu0 0
      %572 = vmatprep.subr.bf16.mxu0 0
      %573 = vmatpush1.bf16.msra.mxu0 0
      %574 = vmatprep.mubr.bf16.mxu0 0
      %575 = vmatmul.mubr.bf16.gmra.mrb[0].mxu0 %v491
      %v576 = vpop.f32.mrb[0].mxu0
      %v577 = vadd.f32 0.0, %v576
      %v578 = vpop.f32.mrb[0].mxu0
      %v579 = vpop.f32.mrb[0].mxu0
      %v580 = vadd.f32 0.0, %v579
      %v581 = vpop.f32.mrb[0].mxu0
      %582 = vmatprep.mubr.bf16.mxu0 0
      %583 = vmatmul.mubr.bf16.gmra.mrb[0].mxu0 %v494
      %v584 = vpop.f32.mrb[0].mxu0
      %v585 = vadd.f32 0.0, %v584
      %v586 = vpop.f32.mrb[0].mxu0
      %v587 = vpop.f32.mrb[0].mxu0
      %v588 = vadd.f32 0.0, %v587
      %v589 = vpop.f32.mrb[0].mxu0
      %590 = vmatprep.mubr.bf16.mxu0 0
      %591 = vmatmul.mubr.bf16.gmra.mrb[0].mxu0 %v497
      %v592 = vpop.f32.mrb[0].mxu0
      %v593 = vadd.f32 0.0, %v592
      %v594 = vpop.f32.mrb[0].mxu0
      %v595 = vpop.f32.mrb[0].mxu0
      %v596 = vadd.f32 0.0, %v595
      %v597 = vpop.f32.mrb[0].mxu0
      %598 = vmatprep.mubr.bf16.mxu0 0
      %599 = vmatmul.mubr.bf16.gmra.mrb[0].mxu0 %v500
      %v600 = vpop.f32.mrb[0].mxu0
      %v601 = vadd.f32 0.0, %v600
      %v602 = vpop.f32.mrb[0].mxu0
      %v603 = vpop.f32.mrb[0].mxu0
      %v604 = vadd.f32 0.0, %v603
      %v605 = vpop.f32.mrb[0].mxu0
      %606 = vmatprep.mubr.bf16.mxu0 0
      %607 = vmatmul.mubr.bf16.gmra.mrb[0].mxu0 %v503
      %v608 = vpop.f32.mrb[0].mxu0
      %v609 = vadd.f32 0.0, %v608
      %v610 = vpop.f32.mrb[0].mxu0
      %v611 = vpop.f32.mrb[0].mxu0
      %v612 = vadd.f32 0.0, %v611
      %v613 = vpop.f32.mrb[0].mxu0
      %614 = vmatprep.mubr.bf16.mxu0 0
      %615 = vmatmul.mubr.bf16.gmra.mrb[0].mxu0 %v506
      %v616 = vpop.f32.mrb[0].mxu0
      %v617 = vadd.f32 0.0, %v616
      %v618 = vpop.f32.mrb[0].mxu0
      %v619 = vpop.f32.mrb[0].mxu0
      %v620 = vadd.f32 0.0, %v619
      %v621 = vpop.f32.mrb[0].mxu0
      %622 = vmatprep.mubr.bf16.mxu0 0
      %623 = vmatmul.mubr.bf16.gmra.mrb[0].mxu0 %v509
      %v624 = vpop.f32.mrb[0].mxu0
      %v625 = vadd.f32 0.0, %v624
      %v626 = vpop.f32.mrb[0].mxu0
      %v627 = vpop.f32.mrb[0].mxu0
      %v628 = vadd.f32 0.0, %v627
      %v629 = vpop.f32.mrb[0].mxu0
      %630 = vmatprep.mubr.bf16.mxu0 0
      %631 = vmatmul.mubr.bf16.gmra.mrb[0].mxu0 %v512
      %v632 = vpop.f32.mrb[0].mxu0
      %v633 = vadd.f32 0.0, %v632
      %v634 = vpop.f32.mrb[0].mxu0
      %v635 = vpop.f32.mrb[0].mxu0
      %v636 = vadd.f32 0.0, %v635
      %v637 = vpop.f32.mrb[0].mxu0
      %638 = vmatprep.mubr.bf16.mxu0 0
      %639 = vmatmul.mubr.bf16.gmra.mrb[0].mxu0 %v515
      %v640 = vpop.f32.mrb[0].mxu0
      %v641 = vadd.f32 0.0, %v640
      %v642 = vpop.f32.mrb[0].mxu0
      %v643 = vpop.f32.mrb[0].mxu0
      %v644 = vadd.f32 0.0, %v643
      %v645 = vpop.f32.mrb[0].mxu0
      %646 = vmatprep.mubr.bf16.mxu0 0
      %647 = vmatmul.mubr.bf16.gmra.mrb[0].mxu0 %v518
      %v648 = vpop.f32.mrb[0].mxu0
      %v649 = vadd.f32 0.0, %v648
      %v650 = vpop.f32.mrb[0].mxu0
      %v651 = vpop.f32.mrb[0].mxu0
      %v652 = vadd.f32 0.0, %v651
      %v653 = vpop.f32.mrb[0].mxu0
      %654 = vmatprep.mubr.bf16.mxu0 0
      %655 = vmatmul.mubr.bf16.gmra.mrb[0].mxu0 %v521
      %v656 = vpop.f32.mrb[0].mxu0
      %v657 = vadd.f32 0.0, %v656
      %v658 = vpop.f32.mrb[0].mxu0
      %v659 = vpop.f32.mrb[0].mxu0
      %v660 = vadd.f32 0.0, %v659
      %v661 = vpop.f32.mrb[0].mxu0
      %662 = vmatprep.mubr.bf16.mxu0 0
      %663 = vmatmul.mubr.bf16.gmra.mrb[0].mxu0 %v524
      %v664 = vpop.f32.mrb[0].mxu0
      %v665 = vadd.f32 0.0, %v664
      %v666 = vpop.f32.mrb[0].mxu0
      %v667 = vpop.f32.mrb[0].mxu0
      %v668 = vadd.f32 0.0, %v667
      %v669 = vpop.f32.mrb[0].mxu0
      %670 = vmatprep.mubr.bf16.mxu0 0
      %671 = vmatmul.mubr.bf16.gmra.mrb[0].mxu0 %v527
      %v672 = vpop.f32.mrb[0].mxu0
      %v673 = vadd.f32 0.0, %v672
      %v674 = vpop.f32.mrb[0].mxu0
      %v675 = vpop.f32.mrb[0].mxu0
      %v676 = vadd.f32 0.0, %v675
      %v677 = vpop.f32.mrb[0].mxu0
      %678 = vmatprep.mubr.bf16.mxu0 0
      %679 = vmatmul.mubr.bf16.gmra.mrb[0].mxu0 %v530
      %v680 = vpop.f32.mrb[0].mxu0
      %v681 = vadd.f32 0.0, %v680
      %v682 = vpop.f32.mrb[0].mxu0
      %v683 = vpop.f32.mrb[0].mxu0
      %v684 = vadd.f32 0.0, %v683
      %v685 = vpop.f32.mrb[0].mxu0
      %686 = vmatprep.mubr.bf16.mxu0 0
      %687 = vmatmul.mubr.bf16.gmra.mrb[0].mxu0 %v533
      %v688 = vpop.f32.mrb[0].mxu0
      %v689 = vadd.f32 0.0, %v688
      %v690 = vpop.f32.mrb[0].mxu0
      %v691 = vpop.f32.mrb[0].mxu0
      %v692 = vadd.f32 0.0, %v691
      %v693 = vpop.f32.mrb[0].mxu0
      %694 = vmatprep.mubr.bf16.mxu0 0
      %695 = vmatmul.mubr.bf16.gmra.mrb[0].mxu0 %v536
      %v696 = vpop.f32.mrb[0].mxu0
      %v697 = vadd.f32 0.0, %v696
      %v698 = vpop.f32.mrb[0].mxu0
      %v699 = vpop.f32.mrb[0].mxu0
      %v700 = vadd.f32 0.0, %v699
      %v701 = vpop.f32.mrb[0].mxu0
      %702 = vdwg.mxu0
      %v703 = vadd.f32 %v325, %v577
      %v704 = vadd.f32 %v326, %v580
      %v705 = vadd.f32 %v327, %v585
      %v706 = vadd.f32 %v328, %v588
      %v707 = vadd.f32 %v329, %v593
      %v708 = vadd.f32 %v330, %v596
      %v709 = vadd.f32 %v331, %v601
      %v710 = vadd.f32 %v332, %v604
      %v711 = vadd.f32 %v333, %v609
      %v712 = vadd.f32 %v334, %v612
      %v713 = vadd.f32 %v335, %v617
      %v714 = vadd.f32 %v336, %v620
      %v715 = vadd.f32 %v337, %v625
      %v716 = vadd.f32 %v338, %v628
      %v717 = vadd.f32 %v339, %v633
      %v718 = vadd.f32 %v340, %v636
      %v719 = vadd.f32 %v341, %v641
      %v720 = vadd.f32 %v342, %v644
      %v721 = vadd.f32 %v343, %v649
      %v722 = vadd.f32 %v344, %v652
      %v723 = vadd.f32 %v345, %v657
      %v724 = vadd.f32 %v346, %v660
      %v725 = vadd.f32 %v347, %v665
      %v726 = vadd.f32 %v348, %v668
      %v727 = vadd.f32 %v349, %v673
      %v728 = vadd.f32 %v350, %v676
      %v729 = vadd.f32 %v351, %v681
      %v730 = vadd.f32 %v352, %v684
      %v731 = vadd.f32 %v353, %v689
      %v732 = vadd.f32 %v354, %v692
      %v733 = vadd.f32 %v355, %v697
      %v734 = vadd.f32 %v356, %v700
      %vm735 = vcmask 64512
      %736 = vst.msk [vmem:[%s285] sm:$0xff] %vm735, %v703
      %737 = vst.msk [vmem:[%s285 + $0x8] sm:$0xff] %vm735, %v704
      %738 = vst.msk [vmem:[%s285 + $0x10] sm:$0xff] %vm735, %v705
      %739 = vst.msk [vmem:[%s285 + $0x18] sm:$0xff] %vm735, %v706
      %740 = vst.msk [vmem:[%s285 + $0x20] sm:$0xff] %vm735, %v707
      %741 = vst.msk [vmem:[%s285 + $0x28] sm:$0xff] %vm735, %v708
      %742 = vst.msk [vmem:[%s285 + $0x30] sm:$0xff] %vm735, %v709
      %743 = vst.msk [vmem:[%s285 + $0x38] sm:$0xff] %vm735, %v710
      %744 = vst.msk [vmem:[%s285 + $0x40] sm:$0xff] %vm735, %v711
      %745 = vst.msk [vmem:[%s285 + $0x48] sm:$0xff] %vm735, %v712
      %746 = vst.msk [vmem:[%s285 + $0x50] sm:$0xff] %vm735, %v713
      %747 = vst.msk [vmem:[%s285 + $0x58] sm:$0xff] %vm735, %v714
      %748 = vst.msk [vmem:[%s285 + $0x60] sm:$0xff] %vm735, %v715
      %749 = vst.msk [vmem:[%s285 + $0x68] sm:$0xff] %vm735, %v716
      %750 = vst.msk [vmem:[%s285 + $0x70] sm:$0xff] %vm735, %v717
      %751 = vst.msk [vmem:[%s285 + $0x78] sm:$0xff] %vm735, %v718
      %752 = vst.msk [vmem:[%s285 + $0x80] sm:$0xff] %vm735, %v719
      %753 = vst.msk [vmem:[%s285 + $0x88] sm:$0xff] %vm735, %v720
      %754 = vst.msk [vmem:[%s285 + $0x90] sm:$0xff] %vm735, %v721
      %755 = vst.msk [vmem:[%s285 + $0x98] sm:$0xff] %vm735, %v722
      %756 = vst.msk [vmem:[%s285 + $0xa0] sm:$0xff] %vm735, %v723
      %757 = vst.msk [vmem:[%s285 + $0xa8] sm:$0xff] %vm735, %v724
      %758 = vst.msk [vmem:[%s285 + $0xb0] sm:$0xff] %vm735, %v725
      %759 = vst.msk [vmem:[%s285 + $0xb8] sm:$0xff] %vm735, %v726
      %760 = vst.msk [vmem:[%s285 + $0xc0] sm:$0xff] %vm735, %v727
      %761 = vst.msk [vmem:[%s285 + $0xc8] sm:$0xff] %vm735, %v728
      %762 = vst.msk [vmem:[%s285 + $0xd0] sm:$0xff] %vm735, %v729
      %763 = vst.msk [vmem:[%s285 + $0xd8] sm:$0xff] %vm735, %v730
      %764 = vst.msk [vmem:[%s285 + $0xe0] sm:$0xff] %vm735, %v731
      %765 = vst.msk [vmem:[%s285 + $0xe8] sm:$0xff] %vm735, %v732
      %766 = vst.msk [vmem:[%s285 + $0xf0] sm:$0xff] %vm735, %v733
      %767 = vst.msk [vmem:[%s285 + $0xf8] sm:$0xff] %vm735, %v734
      // Predicated region
      $region41: #{quant_conv2d_pallas.3} parent=35 // pred_check
        %p768 = pneg %p288
      $region42: #{quant_conv2d_pallas.3} parent=35 // pred_check_branch
        %770 = sbr.rel (%p768) target = $region44
      $region43: #{quant_conv2d_pallas.3} parent=35 // pred_region
        %v771 = vld [vmem:[%s285] sm:$0xff]
        %v772 = vld [vmem:[%s285 + $0x8] sm:$0xff]
        %v773 = vld [vmem:[%s285 + $0x10] sm:$0xff]
        %v774 = vld [vmem:[%s285 + $0x18] sm:$0xff]
        %v775 = vld [vmem:[%s285 + $0x20] sm:$0xff]
        %v776 = vld [vmem:[%s285 + $0x28] sm:$0xff]
        %v777 = vld [vmem:[%s285 + $0x30] sm:$0xff]
        %v778 = vld [vmem:[%s285 + $0x38] sm:$0xff]
        %v779 = vld [vmem:[%s285 + $0x40] sm:$0xff]
        %v780 = vld [vmem:[%s285 + $0x48] sm:$0xff]
        %v781 = vld [vmem:[%s285 + $0x50] sm:$0xff]
        %v782 = vld [vmem:[%s285 + $0x58] sm:$0xff]
        %v783 = vld [vmem:[%s285 + $0x60] sm:$0xff]
        %v784 = vld [vmem:[%s285 + $0x68] sm:$0xff]
        %v785 = vld [vmem:[%s285 + $0x70] sm:$0xff]
        %v786 = vld [vmem:[%s285 + $0x78] sm:$0xff]
        %v787 = vld [vmem:[%s285 + $0x80] sm:$0xff]
        %v788 = vld [vmem:[%s285 + $0x88] sm:$0xff]
        %v789 = vld [vmem:[%s285 + $0x90] sm:$0xff]
        %v790 = vld [vmem:[%s285 + $0x98] sm:$0xff]
        %v791 = vld [vmem:[%s285 + $0xa0] sm:$0xff]
        %v792 = vld [vmem:[%s285 + $0xa8] sm:$0xff]
        %v793 = vld [vmem:[%s285 + $0xb0] sm:$0xff]
        %v794 = vld [vmem:[%s285 + $0xb8] sm:$0xff]
        %v795 = vld [vmem:[%s285 + $0xc0] sm:$0xff]
        %v796 = vld [vmem:[%s285 + $0xc8] sm:$0xff]
        %v797 = vld [vmem:[%s285 + $0xd0] sm:$0xff]
        %v798 = vld [vmem:[%s285 + $0xd8] sm:$0xff]
        %v799 = vld [vmem:[%s285 + $0xe0] sm:$0xff]
        %v800 = vld [vmem:[%s285 + $0xe8] sm:$0xff]
        %v801 = vld [vmem:[%s285 + $0xf0] sm:$0xff]
        %v802 = vld [vmem:[%s285 + $0xf8] sm:$0xff]
        %s803 = sld [smem:[#allocation2]]
        %v804 = vstv %s803
        %v805 = vmul.f32 %v771, %v804
        %v806 = vmul.f32 %v772, %v804
        %v807 = vmul.f32 %v773, %v804
        %v808 = vmul.f32 %v774, %v804
        %v809 = vmul.f32 %v775, %v804
        %v810 = vmul.f32 %v776, %v804
        %v811 = vmul.f32 %v777, %v804
        %v812 = vmul.f32 %v778, %v804
        %v813 = vmul.f32 %v779, %v804
        %v814 = vmul.f32 %v780, %v804
        %v815 = vmul.f32 %v781, %v804
        %v816 = vmul.f32 %v782, %v804
        %v817 = vmul.f32 %v783, %v804
        %v818 = vmul.f32 %v784, %v804
        %v819 = vmul.f32 %v785, %v804
        %v820 = vmul.f32 %v786, %v804
        %v821 = vmul.f32 %v787, %v804
        %v822 = vmul.f32 %v788, %v804
        %v823 = vmul.f32 %v789, %v804
        %v824 = vmul.f32 %v790, %v804
        %v825 = vmul.f32 %v791, %v804
        %v826 = vmul.f32 %v792, %v804
        %v827 = vmul.f32 %v793, %v804
        %v828 = vmul.f32 %v794, %v804
        %v829 = vmul.f32 %v795, %v804
        %v830 = vmul.f32 %v796, %v804
        %v831 = vmul.f32 %v797, %v804
        %v832 = vmul.f32 %v798, %v804
        %v833 = vmul.f32 %v799, %v804
        %v834 = vmul.f32 %v800, %v804
        %v835 = vmul.f32 %v801, %v804
        %v836 = vmul.f32 %v802, %v804
        %v837 = vld [vmem:[%s277] sm:$0x1]
        %v839 = vlaneseq
        %v840 = vshrl.u32 %v839, 7
        %v841 = vsub.s32 0, %v840
        %v842 = vrot.slane %v837, %v841
        %v844 = vadd.f32 %v805, %v842
        %v845 = vadd.f32 %v806, %v842
        %v846 = vadd.f32 %v807, %v842
        %v847 = vadd.f32 %v808, %v842
        %v848 = vadd.f32 %v809, %v842
        %v849 = vadd.f32 %v810, %v842
        %v850 = vadd.f32 %v811, %v842
        %v851 = vadd.f32 %v812, %v842
        %v852 = vadd.f32 %v813, %v842
        %v853 = vadd.f32 %v814, %v842
        %v854 = vadd.f32 %v815, %v842
        %v855 = vadd.f32 %v816, %v842
        %v856 = vadd.f32 %v817, %v842
        %v857 = vadd.f32 %v818, %v842
        %v858 = vadd.f32 %v819, %v842
        %v859 = vadd.f32 %v820, %v842
        %v860 = vadd.f32 %v821, %v842
        %v861 = vadd.f32 %v822, %v842
        %v862 = vadd.f32 %v823, %v842
        %v863 = vadd.f32 %v824, %v842
        %v864 = vadd.f32 %v825, %v842
        %v865 = vadd.f32 %v826, %v842
        %v866 = vadd.f32 %v827, %v842
        %v867 = vadd.f32 %v828, %v842
        %v868 = vadd.f32 %v829, %v842
        %v869 = vadd.f32 %v830, %v842
        %v870 = vadd.f32 %v831, %v842
        %v871 = vadd.f32 %v832, %v842
        %v872 = vadd.f32 %v833, %v842
        %v873 = vadd.f32 %v834, %v842
        %v874 = vadd.f32 %v835, %v842
        %v875 = vadd.f32 %v836, %v842
        %876 = vst.msk [vmem:[%s285] sm:$0xff] %vm735, %v844
        %877 = vst.msk [vmem:[%s285 + $0x8] sm:$0xff] %vm735, %v845
        %878 = vst.msk [vmem:[%s285 + $0x10] sm:$0xff] %vm735, %v846
        %879 = vst.msk [vmem:[%s285 + $0x18] sm:$0xff] %vm735, %v847
        %880 = vst.msk [vmem:[%s285 + $0x20] sm:$0xff] %vm735, %v848
        %881 = vst.msk [vmem:[%s285 + $0x28] sm:$0xff] %vm735, %v849
        %882 = vst.msk [vmem:[%s285 + $0x30] sm:$0xff] %vm735, %v850
        %883 = vst.msk [vmem:[%s285 + $0x38] sm:$0xff] %vm735, %v851
        %884 = vst.msk [vmem:[%s285 + $0x40] sm:$0xff] %vm735, %v852
        %885 = vst.msk [vmem:[%s285 + $0x48] sm:$0xff] %vm735, %v853
        %886 = vst.msk [vmem:[%s285 + $0x50] sm:$0xff] %vm735, %v854
        %887 = vst.msk [vmem:[%s285 + $0x58] sm:$0xff] %vm735, %v855
        %888 = vst.msk [vmem:[%s285 + $0x60] sm:$0xff] %vm735, %v856
        %889 = vst.msk [vmem:[%s285 + $0x68] sm:$0xff] %vm735, %v857
        %890 = vst.msk [vmem:[%s285 + $0x70] sm:$0xff] %vm735, %v858
        %891 = vst.msk [vmem:[%s285 + $0x78] sm:$0xff] %vm735, %v859
        %892 = vst.msk [vmem:[%s285 + $0x80] sm:$0xff] %vm735, %v860
        %893 = vst.msk [vmem:[%s285 + $0x88] sm:$0xff] %vm735, %v861
        %894 = vst.msk [vmem:[%s285 + $0x90] sm:$0xff] %vm735, %v862
        %895 = vst.msk [vmem:[%s285 + $0x98] sm:$0xff] %vm735, %v863
        %896 = vst.msk [vmem:[%s285 + $0xa0] sm:$0xff] %vm735, %v864
        %897 = vst.msk [vmem:[%s285 + $0xa8] sm:$0xff] %vm735, %v865
        %898 = vst.msk [vmem:[%s285 + $0xb0] sm:$0xff] %vm735, %v866
        %899 = vst.msk [vmem:[%s285 + $0xb8] sm:$0xff] %vm735, %v867
        %900 = vst.msk [vmem:[%s285 + $0xc0] sm:$0xff] %vm735, %v868
        %901 = vst.msk [vmem:[%s285 + $0xc8] sm:$0xff] %vm735, %v869
        %902 = vst.msk [vmem:[%s285 + $0xd0] sm:$0xff] %vm735, %v870
        %903 = vst.msk [vmem:[%s285 + $0xd8] sm:$0xff] %vm735, %v871
        %904 = vst.msk [vmem:[%s285 + $0xe0] sm:$0xff] %vm735, %v872
        %905 = vst.msk [vmem:[%s285 + $0xe8] sm:$0xff] %vm735, %v873
        %906 = vst.msk [vmem:[%s285 + $0xf0] sm:$0xff] %vm735, %v874
        %907 = vst.msk [vmem:[%s285 + $0xf8] sm:$0xff] %vm735, %v875
      $region44: #{quant_conv2d_pallas.3} parent=35 // pred_fallthru
        _
      %s908 = smul.u32 32, %s21
      %p909 = scmp.lt.s32.totalorder %s908, 63
      %s910 = scalar_select %p909, %s908, 63
      %p911 = scmp.lt.s32.totalorder %s22, 0
      %s912 = scalar_select %p911, %s22, 0
      %s913 = sadd.s32 %s912, %s910
      %s914 = smul.addr %s913, 8
      %s915 = scalar_lea.vmem %s4, %s914
      // Predicated region
      $region45: #{quant_conv2d_pallas.3} parent=35 // pred_check
        %p916 = pneg %p158
      $region46: #{quant_conv2d_pallas.3} parent=35 // pred_check_branch
        %918 = sbr.rel (%p916) target = $region48
      $region47: #{quant_conv2d_pallas.3} parent=35 // pred_region
        %s919 = smul.u32 32, %s21
      $region48: #{quant_conv2d_pallas.3} parent=35 // pred_fallthru
        _
    $region36: #{quant_conv2d_pallas.3} parent=5 // pred_fallthru
      _
    %p920 = scmp.le.s32.totalorder 2, %s11
    // Predicated region
    $region49: #{quant_conv2d_pallas.3} parent=5 // pred_check
      %p921 = pneg %p920
    $region50: #{quant_conv2d_pallas.3} parent=5 // pred_check_branch
      %923 = sbr.rel (%p921) target = $region52
    $region51: #{quant_conv2d_pallas.3} parent=5 // pred_region
      %s924 = ssub.s32 %s11, 2
      // Predicated region
      $region53: #{quant_conv2d_pallas.3} parent=51 // pred_check
        %p925 = pneg %p164
      $region54: #{quant_conv2d_pallas.3} parent=51 // pred_check_branch
        %927 = sbr.rel (%p925) target = $region56
      $region55: #{quant_conv2d_pallas.3} parent=51 // pred_region
        %s928 = smul.u32 32, %s24
        %p929 = scmp.lt.s32.totalorder %s928, 63
        %s930 = scalar_select %p929, %s928, 63
        %p931 = scmp.lt.s32.totalorder %s25, 0
        %s932 = scalar_select %p931, %s25, 0
        %s933 = sadd.s32 %s932, %s930
        %s934 = smul.addr %s933, 8
        %s935 = scalar_lea.vmem %s4, %s934
      $region56: #{quant_conv2d_pallas.3} parent=51 // pred_fallthru
        _
    $region52: #{quant_conv2d_pallas.3} parent=5 // pred_fallthru
      _
  $region6: #{quant_conv2d_pallas.3} parent=0 // loop_footer
    %s15 = sadd.s32 1, %s11
  $region7: #{quant_conv2d_pallas.3} parent=0 // loop_footer_branch
    %10 = sbr.rel target = $region3
  $region8: #{quant_conv2d_pallas.3} parent=0 // loop_exit
    _

</llo_original>
